<compile_context>
chip_gen: v7x
topology: tpu7x:2x2x1
jax: 0.10.0
libtpu: 0.0.40
codegen_flags: <defaults>
</compile_context>

<pallas_src>
import functools

import jax
import jax.numpy as jnp
from jax import lax
from jax.experimental import pallas as pl
from jax.experimental.pallas import tpu as pltpu


def _round_up(v, m):
    return ((v + m - 1) // m) * m


def _largest_divisor_leq(n, k):
    k = max(min(k, n), 1)
    for d in range(k, 0, -1):
        if n % d == 0:
            return d
    return 1


def _vmem_budgets():
    """Chip-derived VMEM budgets (v5e/v6e: 128 MiB, v7x: 64 MiB per TC)."""
    cap = 64 * 1024 * 1024            # conservative default = v7x per-TC VMEM
    try:
        info = pltpu.get_tpu_info()
        cap = int(getattr(info, "vmem_capacity_bytes", cap)) or cap
    except Exception:
        pass
    limit = min(int(cap * 0.85), cap - 6 * 1024 * 1024)   # vmem_limit_bytes
    tile_budget = int(cap * 0.45)                          # working-set target
    return limit, tile_budget


_VMEM_LIMIT_BYTES, _VMEM_TILE_BUDGET = _vmem_budgets()

_TARGET_STEP_BYTES = 4 * 1024 * 1024   # streamed (x + out) bytes per grid step
_MAX_TP = 32768                        # sanity cap on the spatial (lane) tile


def _pick_tiles(N, P, Cin, Cout):
    """Choose (batch block, spatial tile, Cout tile) from the chip VMEM budget."""
    cin_p = _round_up(Cin, 8)          # f32 sublane padding
    cout_p = _round_up(Cout, 8)

    # --- Cout tile: keep the double-buffered resident weight block bounded.
    w_budget = min(8 * 1024 * 1024, _VMEM_TILE_BUDGET // 4)
    if 2 * cout_p * cin_p * 4 <= w_budget:
        tco = Cout
    else:
        tco = max(((w_budget // (2 * cin_p * 4)) // 8) * 8, 8)
        tco = min(tco, Cout)
        d = tco
        while d >= 8 and Cout % d != 0:    # prefer a tile that divides Cout
            d -= 8
        if d >= 8:
            tco = d
    tco_p = _round_up(tco, 8)

    # --- spatial / batch blocking: target a few MiB streamed per grid step,
    #     bounded by the double-buffered VMEM working set.
    bytes_per_col = 4 * (cin_p + cout_p)            # x read + out write / column
    avail = _VMEM_TILE_BUDGET - 2 * 2 * tco_p * cin_p * 4 - 256 * 1024
    avail = max(avail, 2 * 1024 * 1024)
    max_cols_vmem = max(avail // (2 * bytes_per_col), 128)
    want_cols = max(_TARGET_STEP_BYTES // bytes_per_col, 128)
    cols = min(want_cols, max_cols_vmem, _MAX_TP)

    if P > cols:
        bn = 1
        tp = max((cols // 128) * 128, 128)          # lane-aligned tile
    else:
        tp = P                                      # whole image per step
        bn = _largest_divisor_leq(N, max(cols // max(P, 1), 1))
        if N >= 2 and bn >= N:
            # keep >= 2 batch blocks (megacore sharding of the stats pass) as
            # long as each step still streams a reasonable amount of data.
            half = _largest_divisor_leq(N, max(N // 2, 1))
            if half * P * bytes_per_col >= (1 << 20):
                bn = half
    return bn, tp, tco


# ----------------------------------------------------------------------------
# Pass 1: per-batch-block moments of x.  Accumulator [Cin+1, Cin]:
#   rows 0..Cin-1 : Gram matrix  X Xᵀ   (summed over the block's batch elems)
#   row  Cin      : spatial column sum of x (as a row vector)
# Grid = (batch blocks "parallel", spatial tiles "arbitrary").
# ----------------------------------------------------------------------------
def _gram_stats_kernel(x_ref, acc_ref, *, total_p, tile_p, bn):
    j = pl.program_id(1)

    @pl.when(j == 0)
    def _():
        acc_ref[...] = jnp.zeros_like(acc_ref)

    ones_row = jnp.ones((1, tile_p), jnp.float32)

    def _accumulate(mask_last_tile):
        total = None
        for b in range(bn):
            x = x_ref[b]                                        # [Cin, tp] f32
            if mask_last_tile:
                col = lax.broadcasted_iota(jnp.int32, x.shape, 1)
                x = jnp.where(col < (total_p - j * tile_p), x, 0.0)
            gram = lax.dot_general(x, x, (((1,), (1,)), ((), ())),
                                   preferred_element_type=jnp.float32)  # [Cin,Cin]
            csum = lax.dot_general(ones_row, x, (((1,), (1,)), ((), ())),
                                   preferred_element_type=jnp.float32)  # [1,Cin]
            contrib = jnp.concatenate([gram, csum], axis=0)     # [Cin+1, Cin]
            total = contrib if total is None else total + contrib
        acc_ref[0] += total

    if total_p % tile_p == 0:
        _accumulate(False)                      # no masking cost on full tiles
    else:
        last = pl.num_programs(1) - 1

        @pl.when(j != last)
        def _():
            _accumulate(False)

        @pl.when(j == last)
        def _():
            _accumulate(True)                   # mask only the partial last tile


# ----------------------------------------------------------------------------
# Pass 2: fused 1x1 conv + batch-norm + ReLU (BN folded into weights/bias).
# ----------------------------------------------------------------------------
def _conv_bn_relu_kernel(x_ref, w_ref, b_ref, o_ref, *, bn):
    w = w_ref[...]                                   # [tco, Cin]
    bias = b_ref[...]                                # [tco, 1]
    for b in range(bn):
        y = jnp.dot(w, x_ref[b], preferred_element_type=jnp.float32)  # [tco, tp]
        o_ref[b] = jnp.maximum(y + bias, 0.0).astype(o_ref.dtype)


@functools.partial(jax.jit, static_argnames=("eps",))
def cg_unit_forward(x_nchw, conv_w, conv_b, bn_gamma, bn_beta, eps=1e-5):
    """Forward of CGUnit.

    x_nchw : [N, Cin, H, W] float32
    conv_w : [Cout, Cin, 1, 1] float32 (PyTorch layout), conv_b : [Cout]
    bn_gamma, bn_beta : [Cout]
    BatchNorm uses training-mode batch statistics (PyTorch default .training).
    """
    N, Cin, H, W = x_nchw.shape
    Cout = conv_w.shape[0]
    P = H * W
    count = jnp.float32(N * P)

    x3d = x_nchw.reshape(N, Cin, P)          # free reshape; spatial on lanes
    w2 = conv_w.reshape(Cout, Cin)

    bn_blk, tp, tco = _pick_tiles(N, P, Cin, Cout)
    n_bblocks = N // bn_blk
    n_co = pl.cdiv(Cout, tco)
    grid_p = pl.cdiv(P, tp)

    # ---- pass 1: x-side moments (Gram + column sum) ----
    moments_blk = pl.pallas_call(
        functools.partial(_gram_stats_kernel, total_p=P, tile_p=tp, bn=bn_blk),
        out_shape=jax.ShapeDtypeStruct((n_bblocks, Cin + 1, Cin), jnp.float32),
        grid_spec=pltpu.PrefetchScalarGridSpec(
            num_scalar_prefetch=0,
            grid=(n_bblocks, grid_p),
            in_specs=[pl.BlockSpec((bn_blk, Cin, tp), lambda bi, j: (bi, 0, j))],
            out_specs=pl.BlockSpec((1, Cin + 1, Cin), lambda bi, j: (bi, 0, 0)),
        ),
        compiler_params=pltpu.CompilerParams(
            dimension_semantics=("parallel", "arbitrary"),
            vmem_limit_bytes=_VMEM_LIMIT_BYTES),
    )(x3d)

    moments = jnp.sum(moments_blk, axis=0)          # [Cin+1, Cin]
    gram = moments[:Cin, :]                         # Σ_n X_n X_nᵀ
    colsum_x = moments[Cin, :]                      # Σ_{n,p} x   [Cin]

    # ---- batch statistics of y = W x + b from x-side moments (tiny glue) ----
    # NOTE: variance via E[y²]−E[y]² from f32-accumulated moments (clamped at
    # 0); for extremely large N·P or |mean|≫std this is less stable than a
    # two-pass variance.
    wc = w2 @ colsum_x                              # [Cout]
    sum_y = wc + count * conv_b
    sumsq_y = (jnp.einsum("ci,ij,cj->c", w2, gram, w2)
               + 2.0 * conv_b * wc + count * conv_b * conv_b)
    mean = sum_y / count
    var = jnp.maximum(sumsq_y / count - mean * mean, 0.0)   # biased var (BN fwd)
    inv_std = lax.rsqrt(var + eps)
    scale = bn_gamma * inv_std
    shift = bn_beta - mean * scale
    # TODO(synk): running_mean/running_var buffer updates (training-mode BN
    # side effect) are not emitted; they can be derived from mean/var here.

    # fold BN into the conv: out = relu((scale*W) x + (scale*b + shift))
    w_eff = scale[:, None] * w2                     # [Cout, Cin]
    b_eff = (scale * conv_b + shift)[:, None]       # [Cout, 1]

    # ---- pass 2: fused conv + BN + ReLU ----
    out3d = pl.pallas_call(
        functools.partial(_conv_bn_relu_kernel, bn=bn_blk),
        out_shape=jax.ShapeDtypeStruct((N, Cout, P), jnp.float32),
        grid_spec=pltpu.PrefetchScalarGridSpec(
            num_scalar_prefetch=0,
            grid=(n_bblocks, n_co, grid_p),
            in_specs=[
                pl.BlockSpec((bn_blk, Cin, tp), lambda bi, co, j: (bi, 0, j)),
                pl.BlockSpec((tco, Cin), lambda bi, co, j: (co, 0)),
                pl.BlockSpec((tco, 1), lambda bi, co, j: (co, 0)),
            ],
            out_specs=pl.BlockSpec((bn_blk, tco, tp),
                                   lambda bi, co, j: (bi, co, j)),
        ),
        compiler_params=pltpu.CompilerParams(
            dimension_semantics=("parallel", "parallel", "parallel"),
            vmem_limit_bytes=_VMEM_LIMIT_BYTES),
    )(x3d, w_eff, b_eff)

    return out3d.reshape(N, Cout, H, W)


def _reference(x_nchw, conv_w, conv_b, bn_gamma, bn_beta, eps=1e-5):
    """Pure-JAX reference matching PyTorch training-mode CGUnit."""
    N, Cin, H, W = x_nchw.shape
    Cout = conv_w.shape[0]
    w2 = conv_w.reshape(Cout, Cin)
    y = jnp.einsum("oc,ncp->nop", w2, x_nchw.reshape(N, Cin, H * W))
    y = y + conv_b[None, :, None]
    mean = jnp.mean(y, axis=(0, 2), keepdims=True)
    var = jnp.mean((y - mean) ** 2, axis=(0, 2), keepdims=True)
    y = (y - mean) / jnp.sqrt(var + eps) * bn_gamma[None, :, None] \
        + bn_beta[None, :, None]
    return jnp.maximum(y, 0.0).reshape(N, Cout, H, W)


if __name__ == "__main__":
    key = jax.random.PRNGKey(0)
    k_x, k_w, k_b, k_g, k_bt = jax.random.split(key, 5)

    N, Cin, Cout, H, W = 2, 4, 8, 16, 16

    x = jax.random.normal(k_x, (N, Cin, H, W), dtype=jnp.float32)
    conv_w = jax.random.normal(k_w, (Cout, Cin, 1, 1), dtype=jnp.float32) * 0.1
    conv_b = jax.random.normal(k_b, (Cout,), dtype=jnp.float32) * 0.1
    bn_gamma = 1.0 + 0.1 * jax.random.normal(k_g, (Cout,), dtype=jnp.float32)
    bn_beta = 0.1 * jax.random.normal(k_bt, (Cout,), dtype=jnp.float32)

    out = cg_unit_forward(x, conv_w, conv_b, bn_gamma, bn_beta)
    out = jax.block_until_ready(out)

    ref = _reference(x, conv_w, conv_b, bn_gamma, bn_beta)
    assert out.shape == (N, Cout, H, W)
    assert jnp.allclose(out, ref, rtol=1e-4, atol=1e-4), "mismatch vs reference"

    print("KERNEL_OK")
</pallas_src>

<mosaic_0001>
module attributes {stable_mosaic.version = 11 : i64} {
  func.func @_gram_stats_kernel(%arg0: i32, %arg1: i32, %arg2: memref<2x4x256xf32, #tpu.memory_space<vmem>>, %arg3: memref<1x5x4xf32, #tpu.memory_space<vmem>>) attributes {dimension_semantics = [#tpu.dimension_semantics<parallel>, #tpu.dimension_semantics<arbitrary>], iteration_bounds = array<i64: 1, 1>, scalar_prefetch = 0 : i64, scratch_operands = 0 : i64, tpu.core_type = #tpu.core_type<tc>, window_params = [{transform_indices = @transform_0, window_bounds = array<i64: 2, 4, 256>}, {transform_indices = @transform_1, window_bounds = array<i64: 1, 5, 4>}]} {
    %c0_i32 = arith.constant 0 : i32
    %0 = arith.cmpi eq, %arg1, %c0_i32 : i32
    %1 = arith.extui %0 : i1 to i32
    %c0_i32_0 = arith.constant 0 : i32
    %2 = arith.cmpi ne, %1, %c0_i32_0 : i32
    scf.if %2 {
      %cst_15 = arith.constant 0.000000e+00 : f32
      %21 = vector.broadcast %cst_15 : f32 to vector<1x5x4xf32>
      %c0_16 = arith.constant 0 : index
      %c0_17 = arith.constant 0 : index
      %c0_18 = arith.constant 0 : index
      %22 = vector.load %arg3[%c0_16, %c0_17, %c0_18] : memref<1x5x4xf32, #tpu.memory_space<vmem>>, vector<1x5x4xf32>
      tpu.vector_store %arg3[%c0_16, %c0_17, %c0_18], %21 {strides = array<i32>} : memref<1x5x4xf32, #tpu.memory_space<vmem>>, vector<1x5x4xf32>,
    } else {
    }
    %cst = arith.constant 1.000000e+00 : f32
    %3 = vector.broadcast %cst : f32 to vector<1x256xf32>
    %c0 = arith.constant 0 : index
    %c0_1 = arith.constant 0 : index
    %c0_2 = arith.constant 0 : index
    %4 = vector.load %arg2[%c0, %c0_1, %c0_2] : memref<2x4x256xf32, #tpu.memory_space<vmem>>, vector<1x4x256xf32>
    %5 = vector.shape_cast %4 : vector<1x4x256xf32> to vector<4x256xf32>
    %cst_3 = arith.constant dense<0.000000e+00> : vector<4x4xf32>
    %6 = tpu.matmul %5, %5, %cst_3 {dimension_numbers = #tpu.dot_dimension_numbers<[1], [1], [0], [0], [0, 0, 1, 0], [], []>} : vector<4x256xf32>, vector<4x256xf32>, vector<4x4xf32> -> vector<4x4xf32>
    %cst_4 = arith.constant dense<0.000000e+00> : vector<1x4xf32>
    %7 = tpu.matmul %3, %5, %cst_4 {dimension_numbers = #tpu.dot_dimension_numbers<[1], [1], [0], [0], [0, 0, 1, 0], [], []>} : vector<1x256xf32>, vector<4x256xf32>, vector<1x4xf32> -> vector<1x4xf32>
    %8 = tpu.concatenate %6, %7 in 0 : vector<4x4xf32>, vector<1x4xf32> -> vector<5x4xf32>
    %c1 = arith.constant 1 : index
    %c0_5 = arith.constant 0 : index
    %c0_6 = arith.constant 0 : index
    %9 = vector.load %arg2[%c1, %c0_5, %c0_6] : memref<2x4x256xf32, #tpu.memory_space<vmem>>, vector<1x4x256xf32>
    %10 = vector.shape_cast %9 : vector<1x4x256xf32> to vector<4x256xf32>
    %cst_7 = arith.constant dense<0.000000e+00> : vector<4x4xf32>
    %11 = tpu.matmul %10, %10, %cst_7 {dimension_numbers = #tpu.dot_dimension_numbers<[1], [1], [0], [0], [0, 0, 1, 0], [], []>} : vector<4x256xf32>, vector<4x256xf32>, vector<4x4xf32> -> vector<4x4xf32>
    %cst_8 = arith.constant dense<0.000000e+00> : vector<1x4xf32>
    %12 = tpu.matmul %3, %10, %cst_8 {dimension_numbers = #tpu.dot_dimension_numbers<[1], [1], [0], [0], [0, 0, 1, 0], [], []>} : vector<1x256xf32>, vector<4x256xf32>, vector<1x4xf32> -> vector<1x4xf32>
    %13 = tpu.concatenate %11, %12 in 0 : vector<4x4xf32>, vector<1x4xf32> -> vector<5x4xf32>
    %14 = arith.addf %8, %13 : vector<5x4xf32>
    %c0_9 = arith.constant 0 : index
    %c0_10 = arith.constant 0 : index
    %c0_11 = arith.constant 0 : index
    %15 = vector.load %arg3[%c0_9, %c0_10, %c0_11] : memref<1x5x4xf32, #tpu.memory_space<vmem>>, vector<1x5x4xf32>
    %16 = vector.shape_cast %15 : vector<1x5x4xf32> to vector<5x4xf32>
    %17 = arith.addf %16, %14 : vector<5x4xf32>
    %c0_12 = arith.constant 0 : index
    %c0_13 = arith.constant 0 : index
    %c0_14 = arith.constant 0 : index
    %18 = vector.load %arg3[%c0_12, %c0_13, %c0_14] : memref<1x5x4xf32, #tpu.memory_space<vmem>>, vector<1x5x4xf32>
    %19 = vector.shape_cast %18 : vector<1x5x4xf32> to vector<5x4xf32>
    %20 = vector.shape_cast %17 : vector<5x4xf32> to vector<1x5x4xf32>
    tpu.vector_store %arg3[%c0_12, %c0_13, %c0_14], %20 {strides = array<i32>} : memref<1x5x4xf32, #tpu.memory_space<vmem>>, vector<1x5x4xf32>,
    return
  }
  func.func @transform_0(%arg0: i32, %arg1: i32) -> (i32, i32, i32) {
    %c0_i32 = arith.constant 0 : i32
    %c0_i32_0 = arith.constant 0 : i32
    return %arg0, %c0_i32, %arg1 : i32, i32, i32
  }
  func.func @transform_1(%arg0: i32, %arg1: i32) -> (i32, i32, i32) {
    %c0_i32 = arith.constant 0 : i32
    %c0_i32_0 = arith.constant 0 : i32
    %c0_i32_1 = arith.constant 0 : i32
    return %arg0, %c0_i32, %c0_i32_0 : i32, i32, i32
  }
}

module attributes {stable_mosaic.version = 11 : i64} {
  func.func @_conv_bn_relu_kernel(%arg0: i32, %arg1: i32, %arg2: i32, %arg3: memref<2x4x256xf32, #tpu.memory_space<vmem>>, %arg4: memref<8x4xf32, #tpu.memory_space<vmem>>, %arg5: memref<8x1xf32, #tpu.memory_space<vmem>>, %arg6: memref<2x8x256xf32, #tpu.memory_space<vmem>>) attributes {dimension_semantics = [#tpu.dimension_semantics<parallel>, #tpu.dimension_semantics<parallel>, #tpu.dimension_semantics<parallel>], iteration_bounds = array<i64: 1, 1, 1>, scalar_prefetch = 0 : i64, scratch_operands = 0 : i64, tpu.core_type = #tpu.core_type<tc>, window_params = [{transform_indices = @transform_0, window_bounds = array<i64: 2, 4, 256>}, {transform_indices = @transform_1, window_bounds = array<i64: 8, 4>}, {transform_indices = @transform_2, window_bounds = array<i64: 8, 1>}, {transform_indices = @transform_3, window_bounds = array<i64: 2, 8, 256>}]} {
    %c0 = arith.constant 0 : index
    %c0_0 = arith.constant 0 : index
    %0 = vector.load %arg4[%c0, %c0_0] : memref<8x4xf32, #tpu.memory_space<vmem>>, vector<8x4xf32>
    %c0_1 = arith.constant 0 : index
    %c0_2 = arith.constant 0 : index
    %1 = vector.load %arg5[%c0_1, %c0_2] : memref<8x1xf32, #tpu.memory_space<vmem>>, vector<8x1xf32>
    %c0_3 = arith.constant 0 : index
    %c0_4 = arith.constant 0 : index
    %c0_5 = arith.constant 0 : index
    %2 = vector.load %arg3[%c0_3, %c0_4, %c0_5] : memref<2x4x256xf32, #tpu.memory_space<vmem>>, vector<1x4x256xf32>
    %3 = vector.shape_cast %2 : vector<1x4x256xf32> to vector<4x256xf32>
    %cst = arith.constant dense<0.000000e+00> : vector<8x256xf32>
    %4 = tpu.matmul %0, %3, %cst {dimension_numbers = #tpu.dot_dimension_numbers<[1], [0], [0], [1], [0, 0, 1, 1], [], []>} : vector<8x4xf32>, vector<4x256xf32>, vector<8x256xf32> -> vector<8x256xf32>
    %5 = vector.broadcast %1 : vector<8x1xf32> to vector<8x256xf32>
    %6 = arith.addf %4, %5 : vector<8x256xf32>
    %cst_6 = arith.constant 0.000000e+00 : f32
    %7 = vector.broadcast %cst_6 : f32 to vector<8x256xf32>
    %8 = arith.maximumf %6, %7 : vector<8x256xf32>
    %c0_7 = arith.constant 0 : index
    %c0_8 = arith.constant 0 : index
    %c0_9 = arith.constant 0 : index
    %9 = vector.load %arg6[%c0_7, %c0_8, %c0_9] : memref<2x8x256xf32, #tpu.memory_space<vmem>>, vector<1x8x256xf32>
    %10 = vector.shape_cast %9 : vector<1x8x256xf32> to vector<8x256xf32>
    %11 = vector.shape_cast %8 : vector<8x256xf32> to vector<1x8x256xf32>
    tpu.vector_store %arg6[%c0_7, %c0_8, %c0_9], %11 {strides = array<i32>} : memref<2x8x256xf32, #tpu.memory_space<vmem>>, vector<1x8x256xf32>,
    %c1 = arith.constant 1 : index
    %c0_10 = arith.constant 0 : index
    %c0_11 = arith.constant 0 : index
    %12 = vector.load %arg3[%c1, %c0_10, %c0_11] : memref<2x4x256xf32, #tpu.memory_space<vmem>>, vector<1x4x256xf32>
    %13 = vector.shape_cast %12 : vector<1x4x256xf32> to vector<4x256xf32>
    %cst_12 = arith.constant dense<0.000000e+00> : vector<8x256xf32>
    %14 = tpu.matmul %0, %13, %cst_12 {dimension_numbers = #tpu.dot_dimension_numbers<[1], [0], [0], [1], [0, 0, 1, 1], [], []>} : vector<8x4xf32>, vector<4x256xf32>, vector<8x256xf32> -> vector<8x256xf32>
    %15 = vector.broadcast %1 : vector<8x1xf32> to vector<8x256xf32>
    %16 = arith.addf %14, %15 : vector<8x256xf32>
    %cst_13 = arith.constant 0.000000e+00 : f32
    %17 = vector.broadcast %cst_13 : f32 to vector<8x256xf32>
    %18 = arith.maximumf %16, %17 : vector<8x256xf32>
    %c1_14 = arith.constant 1 : index
    %c0_15 = arith.constant 0 : index
    %c0_16 = arith.constant 0 : index
    %19 = vector.load %arg6[%c1_14, %c0_15, %c0_16] : memref<2x8x256xf32, #tpu.memory_space<vmem>>, vector<1x8x256xf32>
    %20 = vector.shape_cast %19 : vector<1x8x256xf32> to vector<8x256xf32>
    %21 = vector.shape_cast %18 : vector<8x256xf32> to vector<1x8x256xf32>
    tpu.vector_store %arg6[%c1_14, %c0_15, %c0_16], %21 {strides = array<i32>} : memref<2x8x256xf32, #tpu.memory_space<vmem>>, vector<1x8x256xf32>,
    return
  }
  func.func @transform_0(%arg0: i32, %arg1: i32, %arg2: i32) -> (i32, i32, i32) {
    %c0_i32 = arith.constant 0 : i32
    %c0_i32_0 = arith.constant 0 : i32
    return %arg0, %c0_i32, %arg2 : i32, i32, i32
  }
  func.func @transform_1(%arg0: i32, %arg1: i32, %arg2: i32) -> (i32, i32) {
    %c0_i32 = arith.constant 0 : i32
    %c0_i32_0 = arith.constant 0 : i32
    return %arg1, %c0_i32 : i32, i32
  }
  func.func @transform_2(%arg0: i32, %arg1: i32, %arg2: i32) -> (i32, i32) {
    %c0_i32 = arith.constant 0 : i32
    %c0_i32_0 = arith.constant 0 : i32
    return %arg1, %c0_i32 : i32, i32
  }
  func.func @transform_3(%arg0: i32, %arg1: i32, %arg2: i32) -> (i32, i32, i32) {
    %c0_i32 = arith.constant 0 : i32
    return %arg0, %arg1, %arg2 : i32, i32, i32
  }
}

</mosaic_0001>

<llo_original>
// kernel: cg_unit_forward.2
$region0: #{cg_unit_forward.2}
  #allocation0 [shape = 'u32[]', space=smem, size = 0x4, offset = 0x4, fixed_abs, tag = 'smem constant byte address 0x4 - core index']
  #allocation1 [shape = 'u32[144,128]{1,0:T(1,128)}', space=vmem, size = 0x12000, scoped, tag = 'internal scratch']
  %s0 = inlined_call_operand.vmem [shape: f32[2,4,256], index: 0, kind: input, shape index: {}]
  %s1 = inlined_call_operand.vmem [shape: f32[1,5,4], index: 1, kind: output, shape index: {}]
  %s2 = sld [smem:[#allocation0]]
  $region18: #{cg_unit_forward.2} parent=0
    _
  %s4 = ssub.s32 1, %s2
  %s5 = scalar_select 0, %s4, %s2
  // Predicated region
  $region2: #{cg_unit_forward.2} parent=0 // pred_check
    _
  $region3: #{cg_unit_forward.2} parent=0 // pred_check_branch
    %7 = sbr.rel (0) target = $region5
  $region4: #{cg_unit_forward.2} parent=0 // pred_region
    _
  $region5: #{cg_unit_forward.2} parent=0 // pred_fallthru
    _
  %p8 = scmp.eq.s32.totalorder 0, 0
  // Predicated region
  $region6: #{cg_unit_forward.2} parent=0 // pred_check
    %p9 = pneg %p8
  $region7: #{cg_unit_forward.2} parent=0 // pred_check_branch
    %11 = sbr.rel (%p9) target = $region9
  $region8: #{cg_unit_forward.2} parent=0 // pred_region
    %vm12 = vcmask 28672
    %13 = vst.msk [vmem:[%s1] sm:$0x1f] %vm12, 0.0
  $region9: #{cg_unit_forward.2} parent=0 // pred_fallthru
    _
  %v14 = vld [vmem:[%s0] sm:$0xff]
  %v16 = vcombine.high %v14, %v14
  %18 = vmatprep.subr.mxu0 %v16
  %19 = vmatpush1.xpose.msra.mxu0 %v14
  %20 = vmatprep.subr.mxu0 0.0
  %21 = vmatpush1.xpose.msra.mxu0 0.0
  %22 = vmatprep.subr.mxu0 0.0
  %23 = vmatpush1.xpose.msra.mxu0 0.0
  %24 = vmatprep.subr.mxu0 0.0
  %25 = vmatpush1.xpose.msra.mxu0 0.0
  %26 = vmatprep.subr.mxu0 0.0
  %27 = vmatpush1.xpose.msra.mxu0 0.0
  %28 = vmatprep.subr.mxu0 0.0
  %29 = vmatpush1.xpose.msra.mxu0 0.0
  %30 = vmatprep.subr.mxu0 0.0
  %31 = vmatpush1.xpose.msra.mxu0 0.0
  %32 = vmatprep.subr.mxu0 0.0
  %33 = vmatpush1.xpose.msra.mxu0 0.0
  %34 = vmatprep.subr.mxu0 0.0
  %35 = vmatpush1.xpose.msra.mxu0 0.0
  %36 = vmatprep.subr.mxu0 0.0
  %37 = vmatpush1.xpose.msra.mxu0 0.0
  %38 = vmatprep.subr.mxu0 0.0
  %39 = vmatpush1.xpose.msra.mxu0 0.0
  %40 = vmatprep.subr.mxu0 0.0
  %41 = vmatpush1.xpose.msra.mxu0 0.0
  %42 = vmatprep.subr.mxu0 0.0
  %43 = vmatpush1.xpose.msra.mxu0 0.0
  %44 = vmatprep.subr.mxu0 0.0
  %45 = vmatpush1.xpose.msra.mxu0 0.0
  %46 = vmatprep.subr.mxu0 0.0
  %47 = vmatpush1.xpose.msra.mxu0 0.0
  %48 = vmatprep.subr.mxu0 0.0
  %49 = vmatpush1.xpose.msra.mxu0 0.0
  %50 = vmatprep.subr.mxu0 0.0
  %51 = vmatpush1.xpose.msra.mxu0 0.0
  %52 = vmatprep.subr.mxu0 0.0
  %53 = vmatpush1.xpose.msra.mxu0 0.0
  %54 = vmatprep.subr.mxu0 0.0
  %55 = vmatpush1.xpose.msra.mxu0 0.0
  %56 = vmatprep.subr.mxu0 0.0
  %57 = vmatpush1.xpose.msra.mxu0 0.0
  %58 = vmatprep.subr.mxu0 0.0
  %59 = vmatpush1.xpose.msra.mxu0 0.0
  %60 = vmatprep.subr.mxu0 0.0
  %61 = vmatpush1.xpose.msra.mxu0 0.0
  %62 = vmatprep.subr.mxu0 0.0
  %63 = vmatpush1.xpose.msra.mxu0 0.0
  %64 = vmatprep.subr.mxu0 0.0
  %65 = vmatpush1.xpose.msra.mxu0 0.0
  %66 = vmatprep.subr.mxu0 0.0
  %67 = vmatpush1.xpose.msra.mxu0 0.0
  %68 = vmatprep.subr.mxu0 0.0
  %69 = vmatpush1.xpose.msra.mxu0 0.0
  %70 = vmatprep.subr.mxu0 0.0
  %71 = vmatpush1.xpose.msra.mxu0 0.0
  %72 = vmatprep.subr.mxu0 0.0
  %73 = vmatpush1.xpose.msra.mxu0 0.0
  %74 = vmatprep.subr.mxu0 0.0
  %75 = vmatpush1.xpose.msra.mxu0 0.0
  %76 = vmatprep.subr.mxu0 0.0
  %77 = vmatpush1.xpose.msra.mxu0 0.0
  %78 = vmatprep.subr.mxu0 0.0
  %79 = vmatpush1.xpose.msra.mxu0 0.0
  %80 = vmatprep.subr.mxu0 0.0
  %81 = vmatpush1.xpose.msra.mxu0 0.0
  %82 = vmatprep.mubr.f32.mxu0 %v16
  %83 = vmatmul.mubr.f32.gmra.mrb[0].mxu0 %v14
  %v84 = vpop.f32.mrb[0].mxu0
  %v85 = vadd.f32 0.0, %v84
  %v86 = vpop.f32.mrb[0].mxu0
  %87 = vdwg.mxu0
  %88 = vmatprep.subr.mxu0 %v16
  %89 = vmatpush1.xpose.msra.mxu0 %v14
  %90 = vmatprep.subr.mxu0 0.0
  %91 = vmatpush1.xpose.msra.mxu0 0.0
  %92 = vmatprep.subr.mxu0 0.0
  %93 = vmatpush1.xpose.msra.mxu0 0.0
  %94 = vmatprep.subr.mxu0 0.0
  %95 = vmatpush1.xpose.msra.mxu0 0.0
  %96 = vmatprep.subr.mxu0 0.0
  %97 = vmatpush1.xpose.msra.mxu0 0.0
  %98 = vmatprep.subr.mxu0 0.0
  %99 = vmatpush1.xpose.msra.mxu0 0.0
  %100 = vmatprep.subr.mxu0 0.0
  %101 = vmatpush1.xpose.msra.mxu0 0.0
  %102 = vmatprep.subr.mxu0 0.0
  %103 = vmatpush1.xpose.msra.mxu0 0.0
  %104 = vmatprep.subr.mxu0 0.0
  %105 = vmatpush1.xpose.msra.mxu0 0.0
  %106 = vmatprep.subr.mxu0 0.0
  %107 = vmatpush1.xpose.msra.mxu0 0.0
  %108 = vmatprep.subr.mxu0 0.0
  %109 = vmatpush1.xpose.msra.mxu0 0.0
  %110 = vmatprep.subr.mxu0 0.0
  %111 = vmatpush1.xpose.msra.mxu0 0.0
  %112 = vmatprep.subr.mxu0 0.0
  %113 = vmatpush1.xpose.msra.mxu0 0.0
  %114 = vmatprep.subr.mxu0 0.0
  %115 = vmatpush1.xpose.msra.mxu0 0.0
  %116 = vmatprep.subr.mxu0 0.0
  %117 = vmatpush1.xpose.msra.mxu0 0.0
  %118 = vmatprep.subr.mxu0 0.0
  %119 = vmatpush1.xpose.msra.mxu0 0.0
  %120 = vmatprep.subr.mxu0 0.0
  %121 = vmatpush1.xpose.msra.mxu0 0.0
  %122 = vmatprep.subr.mxu0 0.0
  %123 = vmatpush1.xpose.msra.mxu0 0.0
  %124 = vmatprep.subr.mxu0 0.0
  %125 = vmatpush1.xpose.msra.mxu0 0.0
  %126 = vmatprep.subr.mxu0 0.0
  %127 = vmatpush1.xpose.msra.mxu0 0.0
  %128 = vmatprep.subr.mxu0 0.0
  %129 = vmatpush1.xpose.msra.mxu0 0.0
  %130 = vmatprep.subr.mxu0 0.0
  %131 = vmatpush1.xpose.msra.mxu0 0.0
  %132 = vmatprep.subr.mxu0 0.0
  %133 = vmatpush1.xpose.msra.mxu0 0.0
  %134 = vmatprep.subr.mxu0 0.0
  %135 = vmatpush1.xpose.msra.mxu0 0.0
  %136 = vmatprep.subr.mxu0 0.0
  %137 = vmatpush1.xpose.msra.mxu0 0.0
  %138 = vmatprep.subr.mxu0 0.0
  %139 = vmatpush1.xpose.msra.mxu0 0.0
  %140 = vmatprep.subr.mxu0 0.0
  %141 = vmatpush1.xpose.msra.mxu0 0.0
  %142 = vmatprep.subr.mxu0 0.0
  %143 = vmatpush1.xpose.msra.mxu0 0.0
  %144 = vmatprep.subr.mxu0 0.0
  %145 = vmatpush1.xpose.msra.mxu0 0.0
  %146 = vmatprep.subr.mxu0 0.0
  %147 = vmatpush1.xpose.msra.mxu0 0.0
  %148 = vmatprep.subr.mxu0 0.0
  %149 = vmatpush1.xpose.msra.mxu0 0.0
  %150 = vmatprep.subr.mxu0 0.0
  %151 = vmatpush1.xpose.msra.mxu0 0.0
  %152 = vmatprep.mubr.f32.mxu0 1.0
  %153 = vmatmul.mubr.f32.gmra.mrb[0].mxu0 1.0
  %v154 = vpop.f32.mrb[0].mxu0
  %v155 = vadd.f32 0.0, %v154
  %v156 = vpop.f32.mrb[0].mxu0
  %157 = vdwg.mxu0
  %v159 = vrot.slane %v155, 4
  %vm161 = vcmask 1043456
  %v162 = vsel %vm161, %v85, %v159
  %s163 = scalar_lea.vmem %s0, 8
  %v164 = vld [vmem:[%s163] sm:$0xff]
  %v166 = vcombine.high %v164, %v164
  %168 = vmatprep.subr.mxu0 %v166
  %169 = vmatpush1.xpose.msra.mxu0 %v164
  %170 = vmatprep.subr.mxu0 0.0
  %171 = vmatpush1.xpose.msra.mxu0 0.0
  %172 = vmatprep.subr.mxu0 0.0
  %173 = vmatpush1.xpose.msra.mxu0 0.0
  %174 = vmatprep.subr.mxu0 0.0
  %175 = vmatpush1.xpose.msra.mxu0 0.0
  %176 = vmatprep.subr.mxu0 0.0
  %177 = vmatpush1.xpose.msra.mxu0 0.0
  %178 = vmatprep.subr.mxu0 0.0
  %179 = vmatpush1.xpose.msra.mxu0 0.0
  %180 = vmatprep.subr.mxu0 0.0
  %181 = vmatpush1.xpose.msra.mxu0 0.0
  %182 = vmatprep.subr.mxu0 0.0
  %183 = vmatpush1.xpose.msra.mxu0 0.0
  %184 = vmatprep.subr.mxu0 0.0
  %185 = vmatpush1.xpose.msra.mxu0 0.0
  %186 = vmatprep.subr.mxu0 0.0
  %187 = vmatpush1.xpose.msra.mxu0 0.0
  %188 = vmatprep.subr.mxu0 0.0
  %189 = vmatpush1.xpose.msra.mxu0 0.0
  %190 = vmatprep.subr.mxu0 0.0
  %191 = vmatpush1.xpose.msra.mxu0 0.0
  %192 = vmatprep.subr.mxu0 0.0
  %193 = vmatpush1.xpose.msra.mxu0 0.0
  %194 = vmatprep.subr.mxu0 0.0
  %195 = vmatpush1.xpose.msra.mxu0 0.0
  %196 = vmatprep.subr.mxu0 0.0
  %197 = vmatpush1.xpose.msra.mxu0 0.0
  %198 = vmatprep.subr.mxu0 0.0
  %199 = vmatpush1.xpose.msra.mxu0 0.0
  %200 = vmatprep.subr.mxu0 0.0
  %201 = vmatpush1.xpose.msra.mxu0 0.0
  %202 = vmatprep.subr.mxu0 0.0
  %203 = vmatpush1.xpose.msra.mxu0 0.0
  %204 = vmatprep.subr.mxu0 0.0
  %205 = vmatpush1.xpose.msra.mxu0 0.0
  %206 = vmatprep.subr.mxu0 0.0
  %207 = vmatpush1.xpose.msra.mxu0 0.0
  %208 = vmatprep.subr.mxu0 0.0
  %209 = vmatpush1.xpose.msra.mxu0 0.0
  %210 = vmatprep.subr.mxu0 0.0
  %211 = vmatpush1.xpose.msra.mxu0 0.0
  %212 = vmatprep.subr.mxu0 0.0
  %213 = vmatpush1.xpose.msra.mxu0 0.0
  %214 = vmatprep.subr.mxu0 0.0
  %215 = vmatpush1.xpose.msra.mxu0 0.0
  %216 = vmatprep.subr.mxu0 0.0
  %217 = vmatpush1.xpose.msra.mxu0 0.0
  %218 = vmatprep.subr.mxu0 0.0
  %219 = vmatpush1.xpose.msra.mxu0 0.0
  %220 = vmatprep.subr.mxu0 0.0
  %221 = vmatpush1.xpose.msra.mxu0 0.0
  %222 = vmatprep.subr.mxu0 0.0
  %223 = vmatpush1.xpose.msra.mxu0 0.0
  %224 = vmatprep.subr.mxu0 0.0
  %225 = vmatpush1.xpose.msra.mxu0 0.0
  %226 = vmatprep.subr.mxu0 0.0
  %227 = vmatpush1.xpose.msra.mxu0 0.0
  %228 = vmatprep.subr.mxu0 0.0
  %229 = vmatpush1.xpose.msra.mxu0 0.0
  %230 = vmatprep.subr.mxu0 0.0
  %231 = vmatpush1.xpose.msra.mxu0 0.0
  %232 = vmatprep.mubr.f32.mxu0 %v166
  %233 = vmatmul.mubr.f32.gmra.mrb[0].mxu0 %v164
  %v234 = vpop.f32.mrb[0].mxu0
  %v235 = vadd.f32 0.0, %v234
  %v236 = vpop.f32.mrb[0].mxu0
  %237 = vdwg.mxu0
  %238 = vmatprep.subr.mxu0 %v166
  %239 = vmatpush1.xpose.msra.mxu0 %v164
  %240 = vmatprep.subr.mxu0 0.0
  %241 = vmatpush1.xpose.msra.mxu0 0.0
  %242 = vmatprep.subr.mxu0 0.0
  %243 = vmatpush1.xpose.msra.mxu0 0.0
  %244 = vmatprep.subr.mxu0 0.0
  %245 = vmatpush1.xpose.msra.mxu0 0.0
  %246 = vmatprep.subr.mxu0 0.0
  %247 = vmatpush1.xpose.msra.mxu0 0.0
  %248 = vmatprep.subr.mxu0 0.0
  %249 = vmatpush1.xpose.msra.mxu0 0.0
  %250 = vmatprep.subr.mxu0 0.0
  %251 = vmatpush1.xpose.msra.mxu0 0.0
  %252 = vmatprep.subr.mxu0 0.0
  %253 = vmatpush1.xpose.msra.mxu0 0.0
  %254 = vmatprep.subr.mxu0 0.0
  %255 = vmatpush1.xpose.msra.mxu0 0.0
  %256 = vmatprep.subr.mxu0 0.0
  %257 = vmatpush1.xpose.msra.mxu0 0.0
  %258 = vmatprep.subr.mxu0 0.0
  %259 = vmatpush1.xpose.msra.mxu0 0.0
  %260 = vmatprep.subr.mxu0 0.0
  %261 = vmatpush1.xpose.msra.mxu0 0.0
  %262 = vmatprep.subr.mxu0 0.0
  %263 = vmatpush1.xpose.msra.mxu0 0.0
  %264 = vmatprep.subr.mxu0 0.0
  %265 = vmatpush1.xpose.msra.mxu0 0.0
  %266 = vmatprep.subr.mxu0 0.0
  %267 = vmatpush1.xpose.msra.mxu0 0.0
  %268 = vmatprep.subr.mxu0 0.0
  %269 = vmatpush1.xpose.msra.mxu0 0.0
  %270 = vmatprep.subr.mxu0 0.0
  %271 = vmatpush1.xpose.msra.mxu0 0.0
  %272 = vmatprep.subr.mxu0 0.0
  %273 = vmatpush1.xpose.msra.mxu0 0.0
  %274 = vmatprep.subr.mxu0 0.0
  %275 = vmatpush1.xpose.msra.mxu0 0.0
  %276 = vmatprep.subr.mxu0 0.0
  %277 = vmatpush1.xpose.msra.mxu0 0.0
  %278 = vmatprep.subr.mxu0 0.0
  %279 = vmatpush1.xpose.msra.mxu0 0.0
  %280 = vmatprep.subr.mxu0 0.0
  %281 = vmatpush1.xpose.msra.mxu0 0.0
  %282 = vmatprep.subr.mxu0 0.0
  %283 = vmatpush1.xpose.msra.mxu0 0.0
  %284 = vmatprep.subr.mxu0 0.0
  %285 = vmatpush1.xpose.msra.mxu0 0.0
  %286 = vmatprep.subr.mxu0 0.0
  %287 = vmatpush1.xpose.msra.mxu0 0.0
  %288 = vmatprep.subr.mxu0 0.0
  %289 = vmatpush1.xpose.msra.mxu0 0.0
  %290 = vmatprep.subr.mxu0 0.0
  %291 = vmatpush1.xpose.msra.mxu0 0.0
  %292 = vmatprep.subr.mxu0 0.0
  %293 = vmatpush1.xpose.msra.mxu0 0.0
  %294 = vmatprep.subr.mxu0 0.0
  %295 = vmatpush1.xpose.msra.mxu0 0.0
  %296 = vmatprep.subr.mxu0 0.0
  %297 = vmatpush1.xpose.msra.mxu0 0.0
  %298 = vmatprep.subr.mxu0 0.0
  %299 = vmatpush1.xpose.msra.mxu0 0.0
  %300 = vmatprep.subr.mxu0 0.0
  %301 = vmatpush1.xpose.msra.mxu0 0.0
  %302 = vmatprep.mubr.f32.mxu0 1.0
  %303 = vmatmul.mubr.f32.gmra.mrb[0].mxu0 1.0
  %v304 = vpop.f32.mrb[0].mxu0
  %v305 = vadd.f32 0.0, %v304
  %v306 = vpop.f32.mrb[0].mxu0
  %307 = vdwg.mxu0
  %v309 = vrot.slane %v305, 4
  %v311 = vsel %vm161, %v235, %v309
  %v312 = vadd.f32 %v162, %v311
  %v313 = vld [vmem:[%s1] sm:$0x1f]
  %v314 = vadd.f32 %v313, %v312
  %vm315 = vcmask 28672
  %316 = vst.msk [vmem:[%s1] sm:$0x1f] %vm315, %v314
  // Predicated region
  $region10: #{cg_unit_forward.2} parent=0 // pred_check
    _
  $region11: #{cg_unit_forward.2} parent=0 // pred_check_branch
    %318 = sbr.rel (0) target = $region13
  $region12: #{cg_unit_forward.2} parent=0 // pred_region
    _
  $region13: #{cg_unit_forward.2} parent=0 // pred_fallthru
    _
  // Predicated region
  $region14: #{cg_unit_forward.2} parent=0 // pred_check
    _
  $region15: #{cg_unit_forward.2} parent=0 // pred_check_branch
    %320 = sbr.rel (0) target = $region17
  $region16: #{cg_unit_forward.2} parent=0 // pred_region
    _
  $region17: #{cg_unit_forward.2} parent=0 // pred_fallthru
    _

// kernel: cg_unit_forward.3
$region0: #{cg_unit_forward.3}
  #allocation0 [shape = 'u32[]', space=smem, size = 0x4, offset = 0x4, fixed_abs, tag = 'smem constant byte address 0x4 - core index']
  #allocation1 [shape = 'u32[144,128]{1,0:T(1,128)}', space=vmem, size = 0x12000, scoped, tag = 'internal scratch']
  %s0 = inlined_call_operand.vmem [shape: f32[2,4,256], index: 0, kind: input, shape index: {}]
  %s1 = inlined_call_operand.vmem [shape: f32[8,4], index: 1, kind: input, shape index: {}]
  %s2 = inlined_call_operand.vmem [shape: f32[8,1], index: 2, kind: input, shape index: {}]
  %s3 = inlined_call_operand.vmem [shape: f32[2,8,256], index: 3, kind: output, shape index: {}]
  %s4 = sld [smem:[#allocation0]]
  $region22: #{cg_unit_forward.3} parent=0
    _
  %s6 = ssub.s32 1, %s4
  %s7 = scalar_select 0, %s6, %s4
  // Predicated region
  $region2: #{cg_unit_forward.3} parent=0 // pred_check
    _
  $region3: #{cg_unit_forward.3} parent=0 // pred_check_branch
    %9 = sbr.rel (0) target = $region5
  $region4: #{cg_unit_forward.3} parent=0 // pred_region
    _
  $region5: #{cg_unit_forward.3} parent=0 // pred_fallthru
    _
  // Predicated region
  $region6: #{cg_unit_forward.3} parent=0 // pred_check
    _
  $region7: #{cg_unit_forward.3} parent=0 // pred_check_branch
    %11 = sbr.rel (0) target = $region9
  $region8: #{cg_unit_forward.3} parent=0 // pred_region
    _
  $region9: #{cg_unit_forward.3} parent=0 // pred_fallthru
    _
  // Predicated region
  $region10: #{cg_unit_forward.3} parent=0 // pred_check
    _
  $region11: #{cg_unit_forward.3} parent=0 // pred_check_branch
    %13 = sbr.rel (0) target = $region13
  $region12: #{cg_unit_forward.3} parent=0 // pred_region
    _
  $region13: #{cg_unit_forward.3} parent=0 // pred_fallthru
    _
  %v14 = vld [vmem:[%s1] sm:$0xff]
  %v15 = vld [vmem:[%s2] sm:$0xff]
  %v16 = vld [vmem:[%s0] sm:$0xff]
  %18 = vset.pattern.permute.xlu0 0
  %19 = vperm.xlu0 %18, %v15
  %v20 = vpop.permute.xlu0 %19
  %v23 = vcombine.high %v16, %v16
  %vm24 = vcmask 31744
  %v26 = vsel %vm24, %v14, 0
  %vm28 = vcmask 1043456
  %v29 = vsel %vm28, %v16, 0
  %v31 = vsel %vm28, %v23, 0
  %33 = vmatprep.subr.mxu0 %v31
  %34 = vmatpush1.msra.mxu0 %v29
  %35 = vmatprep.subr.mxu0 0.0
  %36 = vmatpush1.msra.mxu0 0.0
  %37 = vmatprep.subr.mxu0 0.0
  %38 = vmatpush1.msra.mxu0 0.0
  %39 = vmatprep.subr.mxu0 0.0
  %40 = vmatpush1.msra.mxu0 0.0
  %41 = vmatprep.subr.mxu0 0.0
  %42 = vmatpush1.msra.mxu0 0.0
  %43 = vmatprep.subr.mxu0 0.0
  %44 = vmatpush1.msra.mxu0 0.0
  %45 = vmatprep.subr.mxu0 0.0
  %46 = vmatpush1.msra.mxu0 0.0
  %47 = vmatprep.subr.mxu0 0.0
  %48 = vmatpush1.msra.mxu0 0.0
  %49 = vmatprep.subr.mxu0 0.0
  %50 = vmatpush1.msra.mxu0 0.0
  %51 = vmatprep.subr.mxu0 0.0
  %52 = vmatpush1.msra.mxu0 0.0
  %53 = vmatprep.subr.mxu0 0.0
  %54 = vmatpush1.msra.mxu0 0.0
  %55 = vmatprep.subr.mxu0 0.0
  %56 = vmatpush1.msra.mxu0 0.0
  %57 = vmatprep.subr.mxu0 0.0
  %58 = vmatpush1.msra.mxu0 0.0
  %59 = vmatprep.subr.mxu0 0.0
  %60 = vmatpush1.msra.mxu0 0.0
  %61 = vmatprep.subr.mxu0 0.0
  %62 = vmatpush1.msra.mxu0 0.0
  %63 = vmatprep.subr.mxu0 0.0
  %64 = vmatpush1.msra.mxu0 0.0
  %65 = vmatprep.subr.mxu0 0.0
  %66 = vmatpush1.msra.mxu0 0.0
  %67 = vmatprep.subr.mxu0 0.0
  %68 = vmatpush1.msra.mxu0 0.0
  %69 = vmatprep.subr.mxu0 0.0
  %70 = vmatpush1.msra.mxu0 0.0
  %71 = vmatprep.subr.mxu0 0.0
  %72 = vmatpush1.msra.mxu0 0.0
  %73 = vmatprep.subr.mxu0 0.0
  %74 = vmatpush1.msra.mxu0 0.0
  %75 = vmatprep.subr.mxu0 0.0
  %76 = vmatpush1.msra.mxu0 0.0
  %77 = vmatprep.subr.mxu0 0.0
  %78 = vmatpush1.msra.mxu0 0.0
  %79 = vmatprep.subr.mxu0 0.0
  %80 = vmatpush1.msra.mxu0 0.0
  %81 = vmatprep.subr.mxu0 0.0
  %82 = vmatpush1.msra.mxu0 0.0
  %83 = vmatprep.subr.mxu0 0.0
  %84 = vmatpush1.msra.mxu0 0.0
  %85 = vmatprep.subr.mxu0 0.0
  %86 = vmatpush1.msra.mxu0 0.0
  %87 = vmatprep.subr.mxu0 0.0
  %88 = vmatpush1.msra.mxu0 0.0
  %89 = vmatprep.subr.mxu0 0.0
  %90 = vmatpush1.msra.mxu0 0.0
  %91 = vmatprep.subr.mxu0 0.0
  %92 = vmatpush1.msra.mxu0 0.0
  %93 = vmatprep.subr.mxu0 0.0
  %94 = vmatpush1.msra.mxu0 0.0
  %95 = vmatprep.subr.mxu0 0.0
  %96 = vmatpush1.msra.mxu0 0.0
  %97 = vmatprep.mubr.f32.mxu0 0.0
  %98 = vmatmul.mubr.f32.gmra.mrb[0].mxu0 %v26
  %v99 = vpop.f32.mrb[0].mxu0
  %v100 = vadd.f32 %v20, %v99
  %v101 = vpop.f32.mrb[0].mxu0
  %v102 = vadd.f32 %v20, %v101
  %103 = vdwg.mxu0
  %v104 = vmax.f32 %v100, 0.0
  %v105 = vmax.f32 %v102, 0.0
  %106 = vst [vmem:[%s3] sm:$0xff] %v104
  %107 = vst [vmem:[%s3 + $0x8] sm:$0xff] %v105
  %s108 = scalar_lea.vmem %s0, 8
  %v109 = vld [vmem:[%s108] sm:$0xff]
  %v111 = vcombine.high %v109, %v109
  %v112 = vsel %vm28, %v109, 0
  %v114 = vsel %vm28, %v111, 0
  %116 = vmatprep.subr.mxu0 %v114
  %117 = vmatpush1.msra.mxu0 %v112
  %118 = vmatprep.subr.mxu0 0.0
  %119 = vmatpush1.msra.mxu0 0.0
  %120 = vmatprep.subr.mxu0 0.0
  %121 = vmatpush1.msra.mxu0 0.0
  %122 = vmatprep.subr.mxu0 0.0
  %123 = vmatpush1.msra.mxu0 0.0
  %124 = vmatprep.subr.mxu0 0.0
  %125 = vmatpush1.msra.mxu0 0.0
  %126 = vmatprep.subr.mxu0 0.0
  %127 = vmatpush1.msra.mxu0 0.0
  %128 = vmatprep.subr.mxu0 0.0
  %129 = vmatpush1.msra.mxu0 0.0
  %130 = vmatprep.subr.mxu0 0.0
  %131 = vmatpush1.msra.mxu0 0.0
  %132 = vmatprep.subr.mxu0 0.0
  %133 = vmatpush1.msra.mxu0 0.0
  %134 = vmatprep.subr.mxu0 0.0
  %135 = vmatpush1.msra.mxu0 0.0
  %136 = vmatprep.subr.mxu0 0.0
  %137 = vmatpush1.msra.mxu0 0.0
  %138 = vmatprep.subr.mxu0 0.0
  %139 = vmatpush1.msra.mxu0 0.0
  %140 = vmatprep.subr.mxu0 0.0
  %141 = vmatpush1.msra.mxu0 0.0
  %142 = vmatprep.subr.mxu0 0.0
  %143 = vmatpush1.msra.mxu0 0.0
  %144 = vmatprep.subr.mxu0 0.0
  %145 = vmatpush1.msra.mxu0 0.0
  %146 = vmatprep.subr.mxu0 0.0
  %147 = vmatpush1.msra.mxu0 0.0
  %148 = vmatprep.subr.mxu0 0.0
  %149 = vmatpush1.msra.mxu0 0.0
  %150 = vmatprep.subr.mxu0 0.0
  %151 = vmatpush1.msra.mxu0 0.0
  %152 = vmatprep.subr.mxu0 0.0
  %153 = vmatpush1.msra.mxu0 0.0
  %154 = vmatprep.subr.mxu0 0.0
  %155 = vmatpush1.msra.mxu0 0.0
  %156 = vmatprep.subr.mxu0 0.0
  %157 = vmatpush1.msra.mxu0 0.0
  %158 = vmatprep.subr.mxu0 0.0
  %159 = vmatpush1.msra.mxu0 0.0
  %160 = vmatprep.subr.mxu0 0.0
  %161 = vmatpush1.msra.mxu0 0.0
  %162 = vmatprep.subr.mxu0 0.0
  %163 = vmatpush1.msra.mxu0 0.0
  %164 = vmatprep.subr.mxu0 0.0
  %165 = vmatpush1.msra.mxu0 0.0
  %166 = vmatprep.subr.mxu0 0.0
  %167 = vmatpush1.msra.mxu0 0.0
  %168 = vmatprep.subr.mxu0 0.0
  %169 = vmatpush1.msra.mxu0 0.0
  %170 = vmatprep.subr.mxu0 0.0
  %171 = vmatpush1.msra.mxu0 0.0
  %172 = vmatprep.subr.mxu0 0.0
  %173 = vmatpush1.msra.mxu0 0.0
  %174 = vmatprep.subr.mxu0 0.0
  %175 = vmatpush1.msra.mxu0 0.0
  %176 = vmatprep.subr.mxu0 0.0
  %177 = vmatpush1.msra.mxu0 0.0
  %178 = vmatprep.subr.mxu0 0.0
  %179 = vmatpush1.msra.mxu0 0.0
  %180 = vmatprep.mubr.f32.mxu0 0.0
  %181 = vmatmul.mubr.f32.gmra.mrb[0].mxu0 %v26
  %v182 = vpop.f32.mrb[0].mxu0
  %v183 = vadd.f32 %v20, %v182
  %v184 = vpop.f32.mrb[0].mxu0
  %v185 = vadd.f32 %v20, %v184
  %186 = vdwg.mxu0
  %v187 = vmax.f32 %v183, 0.0
  %v188 = vmax.f32 %v185, 0.0
  %s189 = scalar_lea.vmem %s3, 16
  %190 = vst [vmem:[%s189] sm:$0xff] %v187
  %191 = vst [vmem:[%s189 + $0x8] sm:$0xff] %v188
  // Predicated region
  $region14: #{cg_unit_forward.3} parent=0 // pred_check
    _
  $region15: #{cg_unit_forward.3} parent=0 // pred_check_branch
    %193 = sbr.rel (0) target = $region17
  $region16: #{cg_unit_forward.3} parent=0 // pred_region
    _
  $region17: #{cg_unit_forward.3} parent=0 // pred_fallthru
    _
  // Predicated region
  $region18: #{cg_unit_forward.3} parent=0 // pred_check
    _
  $region19: #{cg_unit_forward.3} parent=0 // pred_check_branch
    %195 = sbr.rel (0) target = $region21
  $region20: #{cg_unit_forward.3} parent=0 // pred_region
    _
  $region21: #{cg_unit_forward.3} parent=0 // pred_fallthru
    _

</llo_original>
